<compile_context>
chip_gen: v7x
topology: tpu7x:2x2x1
jax: 0.10.0
libtpu: 0.0.40
codegen_flags: <defaults>
</compile_context>

<pallas_src>
import math

import jax
import jax.numpy as jnp
from jax.experimental import pallas as pl
from jax.experimental.pallas import tpu as pltpu


_TARGET_BLOCK_BYTES = 2 * 1024 * 1024  # ~2 MiB x-block: roofline-sized, VMEM-safe


def make_positional_encoding(d_model: int, context_len: int) -> jnp.ndarray:
    """Replicates the PyTorch __init__ sinusoidal table exactly (float32)."""
    position = jnp.arange(0, context_len, dtype=jnp.float32)[:, None]          # (L, 1)
    div_term = jnp.exp(
        jnp.arange(0, d_model, 2, dtype=jnp.float32) * (-math.log(10000.0) / d_model)
    )                                                                           # (D/2,)
    pe = jnp.zeros((context_len, d_model), dtype=jnp.float32)
    pe = pe.at[:, 0::2].set(jnp.sin(position * div_term))
    pe = pe.at[:, 1::2].set(jnp.cos(position * div_term))
    return pe


def _add_pe_kernel(x_ref, pe_ref, o_ref):
    # 3-D path: x_ref/o_ref are (TS, D) (batch dim squeezed), pe_ref is (TS, D).
    # Flat path: x_ref/o_ref are (B, T), pe_ref is (1, T) (sublane broadcast).
    o_ref[...] = (x_ref[...] + pe_ref[...]).astype(o_ref.dtype)


def _sublane_multiple(dtype) -> int:
    itemsize = jnp.dtype(dtype).itemsize
    return 8 * max(1, 4 // itemsize)   # 8 for f32, 16 for bf16, 32 for int8/fp8


def positional_encoding_forward(x: jnp.ndarray, pe: jnp.ndarray) -> jnp.ndarray:
    """x: (B, S, D); pe: (context_len, D) float32. Returns x + pe[:S][None]."""
    b, s, d = x.shape
    itemsize = jnp.dtype(x.dtype).itemsize
    pe_s = pe[:s].astype(x.dtype)  # static slice + dtype match (glue, plain JAX)

    if d % 128 == 0:
        # ---- lane-dense d_model: tile the sequence axis, keep pe resident ----
        sub = _sublane_multiple(x.dtype)
        max_ts = _TARGET_BLOCK_BYTES // (d * itemsize)
        if max_ts >= s:
            ts = s                                      # full extent: always legal
        else:
            ts = max(sub, (max_ts // sub) * sub)        # multiple of sublane tile
            ts = min(ts, s)
        grid = (pl.cdiv(s, ts), b)                      # batch innermost -> pe resident
        return pl.pallas_call(
            _add_pe_kernel,
            out_shape=jax.ShapeDtypeStruct((b, s, d), x.dtype),
            grid_spec=pltpu.PrefetchScalarGridSpec(
                num_scalar_prefetch=0,
                grid=grid,
                in_specs=[
                    pl.BlockSpec((pl.Squeezed(), ts, d), lambda si, bi: (bi, si, 0)),
                    pl.BlockSpec((ts, d), lambda si, bi: (si, 0)),
                ],
                out_specs=pl.BlockSpec(
                    (pl.Squeezed(), ts, d), lambda si, bi: (bi, si, 0)
                ),
            ),
            compiler_params=pltpu.CompilerParams(
                dimension_semantics=("parallel", "parallel")
            ),
        )(x, pe_s)

    # ---- d_model not lane-aligned (e.g. 32): flatten (S, D) -> S*D so stores
    # are unmasked, lane-dense vst's; reshape back outside the kernel. ----
    flat = s * d
    x2 = x.reshape(b, flat)
    pe2 = pe_s.reshape(1, flat)
    max_t = _TARGET_BLOCK_BYTES // max(1, b * itemsize)
    if max_t >= flat:
        t = flat                                        # single tile; full extent
    else:
        t = max(128, (max_t // 128) * 128)              # lane-dense tile
    grid = (pl.cdiv(flat, t),)
    out2 = pl.pallas_call(
        _add_pe_kernel,
        out_shape=jax.ShapeDtypeStruct((b, flat), x.dtype),
        grid_spec=pltpu.PrefetchScalarGridSpec(
            num_scalar_prefetch=0,
            grid=grid,
            in_specs=[
                pl.BlockSpec((b, t), lambda ti: (0, ti)),
                pl.BlockSpec((1, t), lambda ti: (0, ti)),
            ],
            out_specs=pl.BlockSpec((b, t), lambda ti: (0, ti)),
        ),
        compiler_params=pltpu.CompilerParams(dimension_semantics=("parallel",)),
    )(x2, pe2)
    return out2.reshape(b, s, d)


if __name__ == "__main__":
    key = jax.random.PRNGKey(0)

    # Case 1: module's typical small config (d_model=32 -> flattened lane-dense path).
    d_model, context_len, batch, seq_len = 32, 16, 2, 8
    k1, k2 = jax.random.split(key)
    x1 = jax.random.normal(k1, (batch, seq_len, d_model), dtype=jnp.float32)
    pe1 = make_positional_encoding(d_model, context_len)
    out1 = jax.block_until_ready(positional_encoding_forward(x1, pe1))
    ref1 = x1 + pe1[:seq_len][None, :, :]
    assert out1.shape == (batch, seq_len, d_model)
    assert jnp.allclose(out1, ref1, atol=1e-6), "mismatch vs reference (flat path)"

    # Case 2: lane-aligned d_model (exercises the 3-D seq-tiled path with resident pe).
    d_model2, context_len2, seq_len2 = 128, 32, 16
    x2 = jax.random.normal(k2, (batch, seq_len2, d_model2), dtype=jnp.float32)
    pe2 = make_positional_encoding(d_model2, context_len2)
    out2 = jax.block_until_ready(positional_encoding_forward(x2, pe2))
    ref2 = x2 + pe2[:seq_len2][None, :, :]
    assert out2.shape == (batch, seq_len2, d_model2)
    assert jnp.allclose(out2, ref2, atol=1e-6), "mismatch vs reference (3-D path)"

    print("KERNEL_OK")
</pallas_src>

<mosaic_0001>
module attributes {stable_mosaic.version = 11 : i64} {
  func.func @_add_pe_kernel(%arg0: i32, %arg1: memref<2x256xf32, #tpu.memory_space<vmem>>, %arg2: memref<1x256xf32, #tpu.memory_space<vmem>>, %arg3: memref<2x256xf32, #tpu.memory_space<vmem>>) attributes {dimension_semantics = [#tpu.dimension_semantics<parallel>], iteration_bounds = array<i64: 1>, scalar_prefetch = 0 : i64, scratch_operands = 0 : i64, tpu.core_type = #tpu.core_type<tc>, window_params = [{transform_indices = @transform_0, window_bounds = array<i64: 2, 256>}, {transform_indices = @transform_1, window_bounds = array<i64: 1, 256>}, {transform_indices = @transform_2, window_bounds = array<i64: 2, 256>}]} {
    %c0 = arith.constant 0 : index
    %c0_0 = arith.constant 0 : index
    %0 = vector.load %arg1[%c0, %c0_0] : memref<2x256xf32, #tpu.memory_space<vmem>>, vector<2x256xf32>
    %c0_1 = arith.constant 0 : index
    %c0_2 = arith.constant 0 : index
    %1 = vector.load %arg2[%c0_1, %c0_2] : memref<1x256xf32, #tpu.memory_space<vmem>>, vector<1x256xf32>
    %2 = vector.broadcast %1 : vector<1x256xf32> to vector<2x256xf32>
    %3 = arith.addf %0, %2 : vector<2x256xf32>
    %c0_3 = arith.constant 0 : index
    %c0_4 = arith.constant 0 : index
    %4 = vector.load %arg3[%c0_3, %c0_4] : memref<2x256xf32, #tpu.memory_space<vmem>>, vector<2x256xf32>
    tpu.vector_store %arg3[%c0_3, %c0_4], %3 {strides = array<i32>} : memref<2x256xf32, #tpu.memory_space<vmem>>, vector<2x256xf32>,
    return
  }
  func.func @transform_0(%arg0: i32) -> (i32, i32) {
    %c0_i32 = arith.constant 0 : i32
    %c0_i32_0 = arith.constant 0 : i32
    return %c0_i32, %arg0 : i32, i32
  }
  func.func @transform_1(%arg0: i32) -> (i32, i32) {
    %c0_i32 = arith.constant 0 : i32
    %c0_i32_0 = arith.constant 0 : i32
    return %c0_i32, %arg0 : i32, i32
  }
  func.func @transform_2(%arg0: i32) -> (i32, i32) {
    %c0_i32 = arith.constant 0 : i32
    %c0_i32_0 = arith.constant 0 : i32
    return %c0_i32, %arg0 : i32, i32
  }
}

</mosaic_0001>

<llo_original>
// kernel: tpu_custom_call.1
$region0: #{tpu_custom_call.1}
  #allocation0 [shape = 'u32[]', space=smem, size = 0x4, offset = 0x4, fixed_abs, tag = 'smem constant byte address 0x4 - core index']
  #allocation1 [shape = 'u32[144,128]{1,0:T(1,128)}', space=vmem, size = 0x12000, scoped, tag = 'internal scratch']
  %s0 = inlined_call_operand.hbm [shape: f32[2,256], index: 0, kind: input, shape index: {}]
  %s1 = inlined_call_operand.vmem [shape: f32[1,256], index: 1, kind: input, shape index: {}]
  %s2 = inlined_call_operand.hbm [shape: f32[2,256], index: 2, kind: output, shape index: {}]
  %s3 = sld [smem:[#allocation0]]
  $region22: #{tpu_custom_call.1} parent=0
    _
  %s5 = ssub.s32 1, %s3
  %s6 = scalar_select 0, %s5, %s3
  $region1: #{tpu_custom_call.1} parent=0
    #allocation2 [shape = 'u8[2048]{0}', space=vmem, size = 0x800, scoped, tag = 'input window, operand 0, single buffered']
    #allocation3 [shape = 's32[1]{0}', space=sflag, size = 0x4, scoped, tag = 'scoped memory for tpu_custom_call.1']
    #allocation4 [shape = 's32[1]{0}', space=sflag, size = 0x4, scoped, tag = 'scoped memory for tpu_custom_call.1']
    #allocation5 [shape = 'u8[2048]{0}', space=vmem, size = 0x800, scoped, tag = 'output window, operand 0, single buffered']
    %7 = vsyncpa [#allocation3], 0
    %8 = vsyncpa [#allocation4], 0
    // Predicated region
    $region2: #{tpu_custom_call.1} parent=1 // pred_check
      _
    $region3: #{tpu_custom_call.1} parent=1 // pred_check_branch
      %10 = sbr.rel (0) target = $region5
    $region4: #{tpu_custom_call.1} parent=1 // pred_region
      %s12 = ssub.s32 64, 64
      %13 = vsyncadd [#allocation3], %s12
      %s15 = sshll.u32 [#allocation2], 4
      %s16 = int_to_ptr.vmem [resolvable:$true] %s15
      %18 = dma.hbm_to_vmem [thread:$0]  %s0, 64, %s16, [#allocation3]
    $region5: #{tpu_custom_call.1} parent=1 // pred_fallthru
      _
    // Predicated region
    $region6: #{tpu_custom_call.1} parent=1 // pred_check
      _
    $region7: #{tpu_custom_call.1} parent=1 // pred_check_branch
      %20 = sbr.rel (0) target = $region9
    $region8: #{tpu_custom_call.1} parent=1 // pred_region
      _
    $region9: #{tpu_custom_call.1} parent=1 // pred_fallthru
      _
    // Predicated region
    $region10: #{tpu_custom_call.1} parent=1 // pred_check
      _
    $region11: #{tpu_custom_call.1} parent=1 // pred_check_branch
      %22 = sbr.rel (0) target = $region13
    $region12: #{tpu_custom_call.1} parent=1 // pred_region
      %23 = dma.done [#allocation3], 64
    $region13: #{tpu_custom_call.1} parent=1 // pred_fallthru
      _
    %v24 = vld [vmem:[#allocation2] sm:$0xf]
    %v25 = vld [vmem:[%s1] sm:$0x3]
    %v27 = vlaneseq
    %v28 = vshrl.u32 %v27, 7
    %v29 = vsub.s32 0, %v28
    %v30 = vrot.slane %v25, %v29
    %v31 = vlaneseq
    %v32 = vshrl.u32 %v31, 7
    %v33 = vsub.s32 1, %v32
    %v34 = vrot.slane %v25, %v33
    %v35 = vcombine.low %v30, %v34
    %v37 = vunpack.c.l.s4 1983009808
    %v38 = vunpack.c.0.s8 %v37
    %v39 = vlaneseq
    %v40 = vshrl.u32 %v39, 7
    %v41 = vsub.s32 %v38, %v40
    %v42 = vrot.slane %v35, %v41
    %v44 = vadd.f32 %v24, %v42
    %45 = vst [vmem:[#allocation5] sm:$0xf] %v44
    // Predicated region
    $region14: #{tpu_custom_call.1} parent=1 // pred_check
      _
    $region15: #{tpu_custom_call.1} parent=1 // pred_check_branch
      %47 = sbr.rel (0) target = $region17
    $region16: #{tpu_custom_call.1} parent=1 // pred_region
      %s49 = ssub.s32 64, 64
      %50 = vsyncadd [#allocation4], %s49
      %s52 = sshll.u32 [#allocation5], 4
      %s53 = int_to_ptr.vmem [resolvable:$true] %s52
      %55 = dma.vmem_to_hbm [thread:$0]  %s53, 64, %s2, [#allocation4]
    $region17: #{tpu_custom_call.1} parent=1 // pred_fallthru
      _
    // Predicated region
    $region18: #{tpu_custom_call.1} parent=1 // pred_check
      _
    $region19: #{tpu_custom_call.1} parent=1 // pred_check_branch
      %57 = sbr.rel (0) target = $region21
    $region20: #{tpu_custom_call.1} parent=1 // pred_region
      %58 = dma.done [#allocation4], 64
    $region21: #{tpu_custom_call.1} parent=1 // pred_fallthru
      _
    %59 = vsyncpa [#allocation3], 1
    %60 = vsyncpa [#allocation4], 1

</llo_original>
